<compile_context>
chip_gen: v7x
topology: tpu7x:2x2x1
jax: 0.10.0
libtpu: 0.0.40
codegen_flags: <defaults>
</compile_context>

<pallas_src>
import jax
import jax.numpy as jnp
import numpy as np
from jax.experimental import pallas as pl
from jax.experimental.pallas import tpu as pltpu

# Shapes implied by the forward pass: view(-1, 3*2*3) => conv+pool output is (3, 2, 3),
# so with kernel (3,5) and pool 2 the input spatial size is (6, 10).
B, H, W = 2, 6, 10
CO, KH, KW = 3, 3, 5
OH, OW = H - KH + 1, W - KW + 1   # 4, 6 (valid conv)
PH, PW = OH // 2, OW // 2         # 2, 3 (max_pool2d(2), floor)
HW = H * W                        # 60  -> GEMM K
NOUT = CO * PH * PW               # 18  -> flattened output width
NCOL = 4 * NOUT                   # 72  -> GEMM N, column order (qh, qw, co, ph, pw)


def _make_expand_constants():
    """Constant (numpy, built once at import) one-hot expansion matrices.

    wmat = (w_flat(1,45) @ W_EXPAND(45, HW*NCOL)).reshape(HW, NCOL)
    bvec =  bias(1,CO)   @ B_EXPAND(CO, NCOL)

    wmat[(oh+kh)*W + (ow+kw), col(qh,qw,co,ph,pw)] = w[co,0,kh,kw] with oh=2*ph+qh,
    ow=2*pw+qw, zero elsewhere.  Column order (qh,qw,co,ph,pw) makes the 2x2 max-pool two
    unit-stride lane-half maxes and leaves pooled lanes in (co,ph,pw) NCHW-flatten order.
    """
    w_expand = np.zeros((CO * KH * KW, HW * NCOL), np.float32)
    b_expand = np.zeros((CO, NCOL), np.float32)
    for qh in range(2):
        for qw in range(2):
            for co in range(CO):
                for ph in range(PH):
                    for pw in range(PW):
                        col = (((qh * 2 + qw) * CO + co) * PH + ph) * PW + pw
                        b_expand[co, col] = 1.0
                        oh, ow = 2 * ph + qh, 2 * pw + qw
                        for kh in range(KH):
                            for kw in range(KW):
                                row = (oh + kh) * W + (ow + kw)
                                widx = co * KH * KW + kh * KW + kw
                                w_expand[widx, row * NCOL + col] = 1.0
    return jnp.asarray(w_expand), jnp.asarray(b_expand)


_W_EXPAND, _B_EXPAND = _make_expand_constants()


def cnn_kernel(x_ref, wmat_ref, bvec_ref, o_ref):
    """x_ref: (TB, HW) f32; wmat_ref: (HW, NCOL) f32; bvec_ref: (1, NCOL) f32;
    o_ref: (TB, NOUT) f32.  All VMEM."""
    # One MXU dot produces all (qh,qw,co,ph,pw) conv outputs for the whole batch block.
    # HIGHEST precision keeps the f32 MXU path exact vs. the HIGHEST-precision reference
    # (needed for the 1e-5 tolerance); K=60 so the extra passes are negligible.
    conv = jnp.dot(x_ref[...], wmat_ref[...],
                   preferred_element_type=jnp.float32,
                   precision=jax.lax.Precision.HIGHEST) + bvec_ref[...]   # (TB, 72)
    # 2x2 max-pool = two unit-stride lane-half maxes (column order (qh, qw, co, ph, pw)).
    p = jnp.maximum(conv[:, :2 * NOUT], conv[:, 2 * NOUT:])               # pool qh -> (TB, 36)
    p = jnp.maximum(p[:, :NOUT], p[:, NOUT:])                             # pool qw -> (TB, 18)
    # ReLU after pool (matches F.relu(F.max_pool2d(...))); lanes already in (co, ph, pw)
    # NCHW-flatten order -> single store, no output assembly.
    o_ref[...] = jnp.maximum(p, 0.0)


def _batch_tile(batch: int) -> int:
    """Batch rows per grid step.  Whole-batch block for tiny / non-8-aligned batches
    (full-dim blocks are exempt from the (8,128) rule); otherwise the largest 8-aligned
    power-of-two divisor <= 1024 so per-step overhead is amortized and blocks pipeline."""
    if batch < 16 or batch % 8 != 0:
        return batch
    tb = 8
    while tb * 2 <= min(batch, 1024) and batch % (tb * 2) == 0:
        tb *= 2
    return tb


@jax.jit
def cnn_forward(x_nchw, w_oihw, bias):
    """x_nchw: (N,1,H,W), w_oihw: (CO,1,KH,KW), bias: (CO,) -> (N, CO*PH*PW)."""
    batch = x_nchw.shape[0]
    x_flat = x_nchw.reshape(batch, HW)                       # C_in == 1; full im2col is on W side
    # Weight-layout transform: one tiny constant matmul, no scatter, no gather.
    wmat = (w_oihw.reshape(1, CO * KH * KW) @ _W_EXPAND).reshape(HW, NCOL)
    bvec = bias.reshape(1, CO) @ _B_EXPAND                    # (1, NCOL)

    tb = _batch_tile(batch)
    grid = (batch // tb,)
    return pl.pallas_call(
        cnn_kernel,
        out_shape=jax.ShapeDtypeStruct((batch, NOUT), jnp.float32),
        grid=grid,
        in_specs=[
            pl.BlockSpec((tb, HW), lambda i: (i, 0)),         # batch block of inputs
            pl.BlockSpec((HW, NCOL), lambda i: (0, 0)),       # weight-stationary GEMM RHS
            pl.BlockSpec((1, NCOL), lambda i: (0, 0)),        # bias row, VMEM-resident
        ],
        out_specs=pl.BlockSpec((tb, NOUT), lambda i: (i, 0)),
        compiler_params=pltpu.CompilerParams(
            dimension_semantics=("parallel",)),               # shard batch across TCs (v7x)
    )(x_flat, wmat, bvec)


def reference(x_nchw, w_oihw, bias):
    """Pure-JAX reference of the PyTorch forward pass."""
    y = jax.lax.conv_general_dilated(
        x_nchw, w_oihw, window_strides=(1, 1), padding="VALID",
        dimension_numbers=("NCHW", "OIHW", "NCHW"),
        precision=jax.lax.Precision.HIGHEST)
    y = y + bias.reshape(1, CO, 1, 1)
    y = jax.lax.reduce_window(y, -jnp.inf, jax.lax.max,
                              window_dimensions=(1, 1, 2, 2),
                              window_strides=(1, 1, 2, 2), padding="VALID")
    y = jnp.maximum(y, 0.0)
    return y.reshape(-1, NOUT)


if __name__ == "__main__":
    key = jax.random.PRNGKey(0)
    kx, kw, kb = jax.random.split(key, 3)

    # Deterministic example input and PyTorch-style (uniform +-1/sqrt(fan_in)) params.
    x = jax.random.normal(kx, (B, 1, H, W), dtype=jnp.float32)
    fan_in = 1 * KH * KW
    bound = 1.0 / np.sqrt(fan_in)
    w = jax.random.uniform(kw, (CO, 1, KH, KW), minval=-bound, maxval=bound,
                           dtype=jnp.float32)
    b = jax.random.uniform(kb, (CO,), minval=-bound, maxval=bound, dtype=jnp.float32)

    out = cnn_forward(x, w, b)
    out = jax.block_until_ready(out)

    ref = reference(x, w, b)
    assert out.shape == (B, NOUT)
    np.testing.assert_allclose(np.asarray(out), np.asarray(ref), rtol=1e-5, atol=1e-5)
    print("KERNEL_OK")
</pallas_src>

<mosaic_0001>
module attributes {stable_mosaic.version = 11 : i64} {
  func.func @cnn_kernel(%arg0: i32, %arg1: memref<2x60xf32, #tpu.memory_space<vmem>>, %arg2: memref<60x72xf32, #tpu.memory_space<vmem>>, %arg3: memref<1x72xf32, #tpu.memory_space<vmem>>, %arg4: memref<2x18xf32, #tpu.memory_space<vmem>>) attributes {dimension_semantics = [#tpu.dimension_semantics<parallel>], iteration_bounds = array<i64: 1>, scalar_prefetch = 0 : i64, scratch_operands = 0 : i64, tpu.core_type = #tpu.core_type<tc>, window_params = [{transform_indices = @transform_0, window_bounds = array<i64: 2, 60>}, {pipeline_mode = #tpu.pipeline_mode<synchronous>, transform_indices = @transform_1, window_bounds = array<i64: 60, 72>}, {pipeline_mode = #tpu.pipeline_mode<synchronous>, transform_indices = @transform_2, window_bounds = array<i64: 1, 72>}, {transform_indices = @transform_3, window_bounds = array<i64: 2, 18>}]} {
    %c0 = arith.constant 0 : index
    %c0_0 = arith.constant 0 : index
    %0 = vector.load %arg1[%c0, %c0_0] : memref<2x60xf32, #tpu.memory_space<vmem>>, vector<2x60xf32>
    %c0_1 = arith.constant 0 : index
    %c0_2 = arith.constant 0 : index
    %1 = vector.load %arg2[%c0_1, %c0_2] : memref<60x72xf32, #tpu.memory_space<vmem>>, vector<60x72xf32>
    %cst = arith.constant dense<0.000000e+00> : vector<2x72xf32>
    %2 = tpu.matmul %0, %1, %cst {dimension_numbers = #tpu.dot_dimension_numbers<[1], [0], [0], [1], [0, 0, 1, 1], [], []>, precision = #tpu.contract_precision<fp32>} : vector<2x60xf32>, vector<60x72xf32>, vector<2x72xf32> -> vector<2x72xf32>
    %c0_3 = arith.constant 0 : index
    %c0_4 = arith.constant 0 : index
    %3 = vector.load %arg3[%c0_3, %c0_4] : memref<1x72xf32, #tpu.memory_space<vmem>>, vector<1x72xf32>
    %4 = vector.broadcast %3 : vector<1x72xf32> to vector<2x72xf32>
    %5 = arith.addf %2, %4 : vector<2x72xf32>
    %6 = vector.extract_strided_slice %5 {offsets = [0, 0], sizes = [2, 36], strides = [1, 1]} : vector<2x72xf32> to vector<2x36xf32>
    %7 = vector.extract_strided_slice %5 {offsets = [0, 36], sizes = [2, 36], strides = [1, 1]} : vector<2x72xf32> to vector<2x36xf32>
    %8 = arith.maximumf %6, %7 : vector<2x36xf32>
    %9 = vector.extract_strided_slice %8 {offsets = [0, 0], sizes = [2, 18], strides = [1, 1]} : vector<2x36xf32> to vector<2x18xf32>
    %10 = vector.extract_strided_slice %8 {offsets = [0, 18], sizes = [2, 18], strides = [1, 1]} : vector<2x36xf32> to vector<2x18xf32>
    %11 = arith.maximumf %9, %10 : vector<2x18xf32>
    %cst_5 = arith.constant 0.000000e+00 : f32
    %12 = vector.broadcast %cst_5 : f32 to vector<2x18xf32>
    %13 = arith.maximumf %11, %12 : vector<2x18xf32>
    %c0_6 = arith.constant 0 : index
    %c0_7 = arith.constant 0 : index
    %14 = vector.load %arg4[%c0_6, %c0_7] : memref<2x18xf32, #tpu.memory_space<vmem>>, vector<2x18xf32>
    tpu.vector_store %arg4[%c0_6, %c0_7], %13 {strides = array<i32>} : memref<2x18xf32, #tpu.memory_space<vmem>>, vector<2x18xf32>,
    return
  }
  func.func @transform_0(%arg0: i32) -> (i32, i32) {
    %c0_i32 = arith.constant 0 : i32
    %c0_i32_0 = arith.constant 0 : i32
    return %arg0, %c0_i32 : i32, i32
  }
  func.func @transform_1(%arg0: i32) -> (i32, i32) {
    %c0_i32 = arith.constant 0 : i32
    %c0_i32_0 = arith.constant 0 : i32
    %c0_i32_1 = arith.constant 0 : i32
    return %c0_i32, %c0_i32_0 : i32, i32
  }
  func.func @transform_2(%arg0: i32) -> (i32, i32) {
    %c0_i32 = arith.constant 0 : i32
    %c0_i32_0 = arith.constant 0 : i32
    %c0_i32_1 = arith.constant 0 : i32
    return %c0_i32, %c0_i32_0 : i32, i32
  }
  func.func @transform_3(%arg0: i32) -> (i32, i32) {
    %c0_i32 = arith.constant 0 : i32
    %c0_i32_0 = arith.constant 0 : i32
    return %arg0, %c0_i32 : i32, i32
  }
}

</mosaic_0001>

<llo_original>
// kernel: cnn_forward.1
$region0: #{cnn_forward.1}
  #allocation0 [shape = 'u32[]', space=smem, size = 0x4, offset = 0x4, fixed_abs, tag = 'smem constant byte address 0x4 - core index']
  #allocation1 [shape = 'u32[144,128]{1,0:T(1,128)}', space=vmem, size = 0x12000, scoped, tag = 'internal scratch']
  %s0 = inlined_call_operand.vmem [shape: f32[2,60], index: 0, kind: input, shape index: {}]
  %s1 = inlined_call_operand.vmem [shape: f32[60,72], index: 1, kind: input, shape index: {}]
  %s2 = inlined_call_operand.vmem [shape: f32[1,72], index: 2, kind: input, shape index: {}]
  %s3 = inlined_call_operand.hbm [shape: f32[2,18], index: 3, kind: output, shape index: {}]
  %s4 = sld [smem:[#allocation0]]
  $region22: #{cnn_forward.1} parent=0
    _
  %s6 = ssub.s32 1, %s4
  %s7 = scalar_select 0, %s6, %s4
  $region1: #{cnn_forward.1} parent=0
    #allocation2 [shape = 'u8[1024]{0}', space=vmem, size = 0x400, scoped, tag = 'output window, operand 0, single buffered']
    #allocation3 [shape = 's32[1]{0}', space=sflag, size = 0x4, scoped, tag = 'scoped memory for cnn_forward.1']
    %8 = vsyncpa [#allocation3], 0
    // Predicated region
    $region2: #{cnn_forward.1} parent=1 // pred_check
      _
    $region3: #{cnn_forward.1} parent=1 // pred_check_branch
      %10 = sbr.rel (0) target = $region5
    $region4: #{cnn_forward.1} parent=1 // pred_region
      _
    $region5: #{cnn_forward.1} parent=1 // pred_fallthru
      _
    // Predicated region
    $region6: #{cnn_forward.1} parent=1 // pred_check
      _
    $region7: #{cnn_forward.1} parent=1 // pred_check_branch
      %12 = sbr.rel (0) target = $region9
    $region8: #{cnn_forward.1} parent=1 // pred_region
      _
    $region9: #{cnn_forward.1} parent=1 // pred_fallthru
      _
    // Predicated region
    $region10: #{cnn_forward.1} parent=1 // pred_check
      _
    $region11: #{cnn_forward.1} parent=1 // pred_check_branch
      %14 = sbr.rel (0) target = $region13
    $region12: #{cnn_forward.1} parent=1 // pred_region
      _
    $region13: #{cnn_forward.1} parent=1 // pred_fallthru
      _
    %v15 = vld [vmem:[%s0] sm:$0x3]
    %v16 = vld [vmem:[%s1] sm:$0xff]
    %v17 = vld [vmem:[%s1 + $0x8] sm:$0xff]
    %v18 = vld [vmem:[%s1 + $0x10] sm:$0xff]
    %v19 = vld [vmem:[%s1 + $0x18] sm:$0xff]
    %v20 = vld [vmem:[%s1 + $0x20] sm:$0xff]
    %v21 = vld [vmem:[%s1 + $0x28] sm:$0xff]
    %v22 = vld [vmem:[%s1 + $0x30] sm:$0xff]
    %v23 = vld [vmem:[%s1 + $0x38] sm:$0xf]
    %v24 = vld [vmem:[%s2] sm:$0x1]
    %v26 = vlaneseq
    %v27 = vshrl.u32 %v26, 7
    %v28 = vsub.s32 0, %v27
    %v29 = vrot.slane %v24, %v28
    %vm31 = vcmask 490496
    %v33 = vsel %vm31, %v15, 0
    %vm35 = vcmask 1043456
    %v37 = vsel %vm35, %v23, 0
    %39 = vmatprep.subr.mxu0 0.0
    %v40 = vand.u32 %v16, 4294901760
    %41 = vmatpush1.msra.mxu0 %v40
    %42 = vmatprep.subr.mxu0 0.0
    %v43 = vand.u32 %v17, 4294901760
    %44 = vmatpush1.msra.mxu0 %v43
    %45 = vmatprep.subr.mxu0 0.0
    %v46 = vand.u32 %v18, 4294901760
    %47 = vmatpush1.msra.mxu0 %v46
    %48 = vmatprep.subr.mxu0 0.0
    %v49 = vand.u32 %v19, 4294901760
    %50 = vmatpush1.msra.mxu0 %v49
    %51 = vmatprep.subr.mxu0 0.0
    %v52 = vand.u32 %v20, 4294901760
    %53 = vmatpush1.msra.mxu0 %v52
    %54 = vmatprep.subr.mxu0 0.0
    %v55 = vand.u32 %v21, 4294901760
    %56 = vmatpush1.msra.mxu0 %v55
    %57 = vmatprep.subr.mxu0 0.0
    %v58 = vand.u32 %v22, 4294901760
    %59 = vmatpush1.msra.mxu0 %v58
    %60 = vmatprep.subr.mxu0 0.0
    %v61 = vand.u32 %v37, 4294901760
    %62 = vmatpush1.msra.mxu0 %v61
    %63 = vmatprep.subr.mxu0 0.0
    %64 = vmatpush1.msra.mxu0 0.0
    %65 = vmatprep.subr.mxu0 0.0
    %66 = vmatpush1.msra.mxu0 0.0
    %67 = vmatprep.subr.mxu0 0.0
    %68 = vmatpush1.msra.mxu0 0.0
    %69 = vmatprep.subr.mxu0 0.0
    %70 = vmatpush1.msra.mxu0 0.0
    %71 = vmatprep.subr.mxu0 0.0
    %72 = vmatpush1.msra.mxu0 0.0
    %73 = vmatprep.subr.mxu0 0.0
    %74 = vmatpush1.msra.mxu0 0.0
    %75 = vmatprep.subr.mxu0 0.0
    %76 = vmatpush1.msra.mxu0 0.0
    %77 = vmatprep.subr.mxu0 0.0
    %78 = vmatpush1.msra.mxu0 0.0
    %79 = vmatprep.subr.mxu0 0.0
    %80 = vmatpush1.msra.mxu0 0.0
    %81 = vmatprep.subr.mxu0 0.0
    %82 = vmatpush1.msra.mxu0 0.0
    %83 = vmatprep.subr.mxu0 0.0
    %84 = vmatpush1.msra.mxu0 0.0
    %85 = vmatprep.subr.mxu0 0.0
    %86 = vmatpush1.msra.mxu0 0.0
    %87 = vmatprep.subr.mxu0 0.0
    %88 = vmatpush1.msra.mxu0 0.0
    %89 = vmatprep.subr.mxu0 0.0
    %90 = vmatpush1.msra.mxu0 0.0
    %91 = vmatprep.subr.mxu0 0.0
    %92 = vmatpush1.msra.mxu0 0.0
    %93 = vmatprep.subr.mxu0 0.0
    %94 = vmatpush1.msra.mxu0 0.0
    %95 = vmatprep.subr.mxu0 0.0
    %96 = vmatpush1.msra.mxu0 0.0
    %97 = vmatprep.subr.mxu0 0.0
    %98 = vmatpush1.msra.mxu0 0.0
    %99 = vmatprep.subr.mxu0 0.0
    %100 = vmatpush1.msra.mxu0 0.0
    %101 = vmatprep.subr.mxu0 0.0
    %102 = vmatpush1.msra.mxu0 0.0
    %103 = vmatprep.subr.mxu0 0.0
    %104 = vmatpush1.msra.mxu0 0.0
    %105 = vmatprep.subr.mxu0 0.0
    %106 = vmatpush1.msra.mxu0 0.0
    %107 = vmatprep.subr.mxu0 0.0
    %108 = vmatpush1.msra.mxu0 0.0
    %109 = vmatprep.subr.mxu0 0.0
    %110 = vmatpush1.msra.mxu0 0.0
    %111 = vmatprep.mubr.f32.mxu0 0.0
    %v112 = vand.u32 %v33, 4294901760
    %v113 = vsub.f32 %v33, %v112
    %v114 = vand.u32 %v113, 4294901760
    %v115 = vsub.f32 %v113, %v114
    %v116 = vand.u32 %v115, 4294901760
    %117 = vmatmul.mubr.f32.gmra.mrb[0].mxu0 %v116
    %v118 = vpop.f32.mrb[0].mxu0
    %v119 = vadd.f32 %v29, %v118
    %v120 = vpop.f32.mrb[0].mxu0
    %121 = vdwg.mxu0
    %122 = vmatprep.subr.mxu0 0.0
    %v123 = vand.u32 %v16, 4294901760
    %v124 = vsub.f32 %v16, %v123
    %v125 = vand.u32 %v124, 4294901760
    %v126 = vsub.f32 %v124, %v125
    %v127 = vand.u32 %v126, 4294901760
    %128 = vmatpush1.msra.mxu0 %v127
    %129 = vmatprep.subr.mxu0 0.0
    %v130 = vand.u32 %v17, 4294901760
    %v131 = vsub.f32 %v17, %v130
    %v132 = vand.u32 %v131, 4294901760
    %v133 = vsub.f32 %v131, %v132
    %v134 = vand.u32 %v133, 4294901760
    %135 = vmatpush1.msra.mxu0 %v134
    %136 = vmatprep.subr.mxu0 0.0
    %v137 = vand.u32 %v18, 4294901760
    %v138 = vsub.f32 %v18, %v137
    %v139 = vand.u32 %v138, 4294901760
    %v140 = vsub.f32 %v138, %v139
    %v141 = vand.u32 %v140, 4294901760
    %142 = vmatpush1.msra.mxu0 %v141
    %143 = vmatprep.subr.mxu0 0.0
    %v144 = vand.u32 %v19, 4294901760
    %v145 = vsub.f32 %v19, %v144
    %v146 = vand.u32 %v145, 4294901760
    %v147 = vsub.f32 %v145, %v146
    %v148 = vand.u32 %v147, 4294901760
    %149 = vmatpush1.msra.mxu0 %v148
    %150 = vmatprep.subr.mxu0 0.0
    %v151 = vand.u32 %v20, 4294901760
    %v152 = vsub.f32 %v20, %v151
    %v153 = vand.u32 %v152, 4294901760
    %v154 = vsub.f32 %v152, %v153
    %v155 = vand.u32 %v154, 4294901760
    %156 = vmatpush1.msra.mxu0 %v155
    %157 = vmatprep.subr.mxu0 0.0
    %v158 = vand.u32 %v21, 4294901760
    %v159 = vsub.f32 %v21, %v158
    %v160 = vand.u32 %v159, 4294901760
    %v161 = vsub.f32 %v159, %v160
    %v162 = vand.u32 %v161, 4294901760
    %163 = vmatpush1.msra.mxu0 %v162
    %164 = vmatprep.subr.mxu0 0.0
    %v165 = vand.u32 %v22, 4294901760
    %v166 = vsub.f32 %v22, %v165
    %v167 = vand.u32 %v166, 4294901760
    %v168 = vsub.f32 %v166, %v167
    %v169 = vand.u32 %v168, 4294901760
    %170 = vmatpush1.msra.mxu0 %v169
    %171 = vmatprep.subr.mxu0 0.0
    %v172 = vand.u32 %v37, 4294901760
    %v173 = vsub.f32 %v37, %v172
    %v174 = vand.u32 %v173, 4294901760
    %v175 = vsub.f32 %v173, %v174
    %v176 = vand.u32 %v175, 4294901760
    %177 = vmatpush1.msra.mxu0 %v176
    %178 = vmatprep.subr.mxu0 0.0
    %179 = vmatpush1.msra.mxu0 0.0
    %180 = vmatprep.subr.mxu0 0.0
    %181 = vmatpush1.msra.mxu0 0.0
    %182 = vmatprep.subr.mxu0 0.0
    %183 = vmatpush1.msra.mxu0 0.0
    %184 = vmatprep.subr.mxu0 0.0
    %185 = vmatpush1.msra.mxu0 0.0
    %186 = vmatprep.subr.mxu0 0.0
    %187 = vmatpush1.msra.mxu0 0.0
    %188 = vmatprep.subr.mxu0 0.0
    %189 = vmatpush1.msra.mxu0 0.0
    %190 = vmatprep.subr.mxu0 0.0
    %191 = vmatpush1.msra.mxu0 0.0
    %192 = vmatprep.subr.mxu0 0.0
    %193 = vmatpush1.msra.mxu0 0.0
    %194 = vmatprep.subr.mxu0 0.0
    %195 = vmatpush1.msra.mxu0 0.0
    %196 = vmatprep.subr.mxu0 0.0
    %197 = vmatpush1.msra.mxu0 0.0
    %198 = vmatprep.subr.mxu0 0.0
    %199 = vmatpush1.msra.mxu0 0.0
    %200 = vmatprep.subr.mxu0 0.0
    %201 = vmatpush1.msra.mxu0 0.0
    %202 = vmatprep.subr.mxu0 0.0
    %203 = vmatpush1.msra.mxu0 0.0
    %204 = vmatprep.subr.mxu0 0.0
    %205 = vmatpush1.msra.mxu0 0.0
    %206 = vmatprep.subr.mxu0 0.0
    %207 = vmatpush1.msra.mxu0 0.0
    %208 = vmatprep.subr.mxu0 0.0
    %209 = vmatpush1.msra.mxu0 0.0
    %210 = vmatprep.subr.mxu0 0.0
    %211 = vmatpush1.msra.mxu0 0.0
    %212 = vmatprep.subr.mxu0 0.0
    %213 = vmatpush1.msra.mxu0 0.0
    %214 = vmatprep.subr.mxu0 0.0
    %215 = vmatpush1.msra.mxu0 0.0
    %216 = vmatprep.subr.mxu0 0.0
    %217 = vmatpush1.msra.mxu0 0.0
    %218 = vmatprep.subr.mxu0 0.0
    %219 = vmatpush1.msra.mxu0 0.0
    %220 = vmatprep.subr.mxu0 0.0
    %221 = vmatpush1.msra.mxu0 0.0
    %222 = vmatprep.subr.mxu0 0.0
    %223 = vmatpush1.msra.mxu0 0.0
    %224 = vmatprep.subr.mxu0 0.0
    %225 = vmatpush1.msra.mxu0 0.0
    %226 = vmatprep.mubr.f32.mxu0 0.0
    %v227 = vand.u32 %v33, 4294901760
    %228 = vmatmul.mubr.f32.gmra.mrb[0].mxu0 %v227
    %v229 = vpop.f32.mrb[0].mxu0
    %v230 = vadd.f32 %v119, %v229
    %v231 = vpop.f32.mrb[0].mxu0
    %232 = vdwg.mxu0
    %233 = vmatprep.subr.mxu0 0.0
    %v234 = vand.u32 %v16, 4294901760
    %v235 = vsub.f32 %v16, %v234
    %236 = vmatpush1.msra.mxu0 %v235
    %237 = vmatprep.subr.mxu0 0.0
    %v238 = vand.u32 %v17, 4294901760
    %v239 = vsub.f32 %v17, %v238
    %240 = vmatpush1.msra.mxu0 %v239
    %241 = vmatprep.subr.mxu0 0.0
    %v242 = vand.u32 %v18, 4294901760
    %v243 = vsub.f32 %v18, %v242
    %244 = vmatpush1.msra.mxu0 %v243
    %245 = vmatprep.subr.mxu0 0.0
    %v246 = vand.u32 %v19, 4294901760
    %v247 = vsub.f32 %v19, %v246
    %248 = vmatpush1.msra.mxu0 %v247
    %249 = vmatprep.subr.mxu0 0.0
    %v250 = vand.u32 %v20, 4294901760
    %v251 = vsub.f32 %v20, %v250
    %252 = vmatpush1.msra.mxu0 %v251
    %253 = vmatprep.subr.mxu0 0.0
    %v254 = vand.u32 %v21, 4294901760
    %v255 = vsub.f32 %v21, %v254
    %256 = vmatpush1.msra.mxu0 %v255
    %257 = vmatprep.subr.mxu0 0.0
    %v258 = vand.u32 %v22, 4294901760
    %v259 = vsub.f32 %v22, %v258
    %260 = vmatpush1.msra.mxu0 %v259
    %261 = vmatprep.subr.mxu0 0.0
    %v262 = vand.u32 %v37, 4294901760
    %v263 = vsub.f32 %v37, %v262
    %264 = vmatpush1.msra.mxu0 %v263
    %265 = vmatprep.subr.mxu0 0.0
    %266 = vmatpush1.msra.mxu0 0.0
    %267 = vmatprep.subr.mxu0 0.0
    %268 = vmatpush1.msra.mxu0 0.0
    %269 = vmatprep.subr.mxu0 0.0
    %270 = vmatpush1.msra.mxu0 0.0
    %271 = vmatprep.subr.mxu0 0.0
    %272 = vmatpush1.msra.mxu0 0.0
    %273 = vmatprep.subr.mxu0 0.0
    %274 = vmatpush1.msra.mxu0 0.0
    %275 = vmatprep.subr.mxu0 0.0
    %276 = vmatpush1.msra.mxu0 0.0
    %277 = vmatprep.subr.mxu0 0.0
    %278 = vmatpush1.msra.mxu0 0.0
    %279 = vmatprep.subr.mxu0 0.0
    %280 = vmatpush1.msra.mxu0 0.0
    %281 = vmatprep.subr.mxu0 0.0
    %282 = vmatpush1.msra.mxu0 0.0
    %283 = vmatprep.subr.mxu0 0.0
    %284 = vmatpush1.msra.mxu0 0.0
    %285 = vmatprep.subr.mxu0 0.0
    %286 = vmatpush1.msra.mxu0 0.0
    %287 = vmatprep.subr.mxu0 0.0
    %288 = vmatpush1.msra.mxu0 0.0
    %289 = vmatprep.subr.mxu0 0.0
    %290 = vmatpush1.msra.mxu0 0.0
    %291 = vmatprep.subr.mxu0 0.0
    %292 = vmatpush1.msra.mxu0 0.0
    %293 = vmatprep.subr.mxu0 0.0
    %294 = vmatpush1.msra.mxu0 0.0
    %295 = vmatprep.subr.mxu0 0.0
    %296 = vmatpush1.msra.mxu0 0.0
    %297 = vmatprep.subr.mxu0 0.0
    %298 = vmatpush1.msra.mxu0 0.0
    %299 = vmatprep.subr.mxu0 0.0
    %300 = vmatpush1.msra.mxu0 0.0
    %301 = vmatprep.subr.mxu0 0.0
    %302 = vmatpush1.msra.mxu0 0.0
    %303 = vmatprep.subr.mxu0 0.0
    %304 = vmatpush1.msra.mxu0 0.0
    %305 = vmatprep.subr.mxu0 0.0
    %306 = vmatpush1.msra.mxu0 0.0
    %307 = vmatprep.subr.mxu0 0.0
    %308 = vmatpush1.msra.mxu0 0.0
    %309 = vmatprep.subr.mxu0 0.0
    %310 = vmatpush1.msra.mxu0 0.0
    %311 = vmatprep.subr.mxu0 0.0
    %312 = vmatpush1.msra.mxu0 0.0
    %313 = vmatprep.mubr.f32.mxu0 0.0
    %v314 = vand.u32 %v33, 4294901760
    %v315 = vsub.f32 %v33, %v314
    %316 = vmatmul.mubr.f32.gmra.mrb[0].mxu0 %v315
    %v317 = vpop.f32.mrb[0].mxu0
    %v318 = vadd.f32 %v230, %v317
    %v319 = vpop.f32.mrb[0].mxu0
    %320 = vdwg.mxu0
    %321 = vmatprep.subr.mxu0 0.0
    %v322 = vand.u32 %v16, 4294901760
    %323 = vmatpush1.msra.mxu0 %v322
    %324 = vmatprep.subr.mxu0 0.0
    %v325 = vand.u32 %v17, 4294901760
    %326 = vmatpush1.msra.mxu0 %v325
    %327 = vmatprep.subr.mxu0 0.0
    %v328 = vand.u32 %v18, 4294901760
    %329 = vmatpush1.msra.mxu0 %v328
    %330 = vmatprep.subr.mxu0 0.0
    %v331 = vand.u32 %v19, 4294901760
    %332 = vmatpush1.msra.mxu0 %v331
    %333 = vmatprep.subr.mxu0 0.0
    %v334 = vand.u32 %v20, 4294901760
    %335 = vmatpush1.msra.mxu0 %v334
    %336 = vmatprep.subr.mxu0 0.0
    %v337 = vand.u32 %v21, 4294901760
    %338 = vmatpush1.msra.mxu0 %v337
    %339 = vmatprep.subr.mxu0 0.0
    %v340 = vand.u32 %v22, 4294901760
    %341 = vmatpush1.msra.mxu0 %v340
    %342 = vmatprep.subr.mxu0 0.0
    %v343 = vand.u32 %v37, 4294901760
    %344 = vmatpush1.msra.mxu0 %v343
    %345 = vmatprep.subr.mxu0 0.0
    %346 = vmatpush1.msra.mxu0 0.0
    %347 = vmatprep.subr.mxu0 0.0
    %348 = vmatpush1.msra.mxu0 0.0
    %349 = vmatprep.subr.mxu0 0.0
    %350 = vmatpush1.msra.mxu0 0.0
    %351 = vmatprep.subr.mxu0 0.0
    %352 = vmatpush1.msra.mxu0 0.0
    %353 = vmatprep.subr.mxu0 0.0
    %354 = vmatpush1.msra.mxu0 0.0
    %355 = vmatprep.subr.mxu0 0.0
    %356 = vmatpush1.msra.mxu0 0.0
    %357 = vmatprep.subr.mxu0 0.0
    %358 = vmatpush1.msra.mxu0 0.0
    %359 = vmatprep.subr.mxu0 0.0
    %360 = vmatpush1.msra.mxu0 0.0
    %361 = vmatprep.subr.mxu0 0.0
    %362 = vmatpush1.msra.mxu0 0.0
    %363 = vmatprep.subr.mxu0 0.0
    %364 = vmatpush1.msra.mxu0 0.0
    %365 = vmatprep.subr.mxu0 0.0
    %366 = vmatpush1.msra.mxu0 0.0
    %367 = vmatprep.subr.mxu0 0.0
    %368 = vmatpush1.msra.mxu0 0.0
    %369 = vmatprep.subr.mxu0 0.0
    %370 = vmatpush1.msra.mxu0 0.0
    %371 = vmatprep.subr.mxu0 0.0
    %372 = vmatpush1.msra.mxu0 0.0
    %373 = vmatprep.subr.mxu0 0.0
    %374 = vmatpush1.msra.mxu0 0.0
    %375 = vmatprep.subr.mxu0 0.0
    %376 = vmatpush1.msra.mxu0 0.0
    %377 = vmatprep.subr.mxu0 0.0
    %378 = vmatpush1.msra.mxu0 0.0
    %379 = vmatprep.subr.mxu0 0.0
    %380 = vmatpush1.msra.mxu0 0.0
    %381 = vmatprep.subr.mxu0 0.0
    %382 = vmatpush1.msra.mxu0 0.0
    %383 = vmatprep.subr.mxu0 0.0
    %384 = vmatpush1.msra.mxu0 0.0
    %385 = vmatprep.subr.mxu0 0.0
    %386 = vmatpush1.msra.mxu0 0.0
    %387 = vmatprep.subr.mxu0 0.0
    %388 = vmatpush1.msra.mxu0 0.0
    %389 = vmatprep.subr.mxu0 0.0
    %390 = vmatpush1.msra.mxu0 0.0
    %391 = vmatprep.subr.mxu0 0.0
    %392 = vmatpush1.msra.mxu0 0.0
    %393 = vmatprep.mubr.f32.mxu0 0.0
    %v394 = vand.u32 %v33, 4294901760
    %v395 = vsub.f32 %v33, %v394
    %v396 = vand.u32 %v395, 4294901760
    %397 = vmatmul.mubr.f32.gmra.mrb[0].mxu0 %v396
    %v398 = vpop.f32.mrb[0].mxu0
    %v399 = vadd.f32 %v318, %v398
    %v400 = vpop.f32.mrb[0].mxu0
    %401 = vdwg.mxu0
    %402 = vmatprep.subr.mxu0 0.0
    %v403 = vand.u32 %v16, 4294901760
    %v404 = vsub.f32 %v16, %v403
    %v405 = vand.u32 %v404, 4294901760
    %406 = vmatpush1.msra.mxu0 %v405
    %407 = vmatprep.subr.mxu0 0.0
    %v408 = vand.u32 %v17, 4294901760
    %v409 = vsub.f32 %v17, %v408
    %v410 = vand.u32 %v409, 4294901760
    %411 = vmatpush1.msra.mxu0 %v410
    %412 = vmatprep.subr.mxu0 0.0
    %v413 = vand.u32 %v18, 4294901760
    %v414 = vsub.f32 %v18, %v413
    %v415 = vand.u32 %v414, 4294901760
    %416 = vmatpush1.msra.mxu0 %v415
    %417 = vmatprep.subr.mxu0 0.0
    %v418 = vand.u32 %v19, 4294901760
    %v419 = vsub.f32 %v19, %v418
    %v420 = vand.u32 %v419, 4294901760
    %421 = vmatpush1.msra.mxu0 %v420
    %422 = vmatprep.subr.mxu0 0.0
    %v423 = vand.u32 %v20, 4294901760
    %v424 = vsub.f32 %v20, %v423
    %v425 = vand.u32 %v424, 4294901760
    %426 = vmatpush1.msra.mxu0 %v425
    %427 = vmatprep.subr.mxu0 0.0
    %v428 = vand.u32 %v21, 4294901760
    %v429 = vsub.f32 %v21, %v428
    %v430 = vand.u32 %v429, 4294901760
    %431 = vmatpush1.msra.mxu0 %v430
    %432 = vmatprep.subr.mxu0 0.0
    %v433 = vand.u32 %v22, 4294901760
    %v434 = vsub.f32 %v22, %v433
    %v435 = vand.u32 %v434, 4294901760
    %436 = vmatpush1.msra.mxu0 %v435
    %437 = vmatprep.subr.mxu0 0.0
    %v438 = vand.u32 %v37, 4294901760
    %v439 = vsub.f32 %v37, %v438
    %v440 = vand.u32 %v439, 4294901760
    %441 = vmatpush1.msra.mxu0 %v440
    %442 = vmatprep.subr.mxu0 0.0
    %443 = vmatpush1.msra.mxu0 0.0
    %444 = vmatprep.subr.mxu0 0.0
    %445 = vmatpush1.msra.mxu0 0.0
    %446 = vmatprep.subr.mxu0 0.0
    %447 = vmatpush1.msra.mxu0 0.0
    %448 = vmatprep.subr.mxu0 0.0
    %449 = vmatpush1.msra.mxu0 0.0
    %450 = vmatprep.subr.mxu0 0.0
    %451 = vmatpush1.msra.mxu0 0.0
    %452 = vmatprep.subr.mxu0 0.0
    %453 = vmatpush1.msra.mxu0 0.0
    %454 = vmatprep.subr.mxu0 0.0
    %455 = vmatpush1.msra.mxu0 0.0
    %456 = vmatprep.subr.mxu0 0.0
    %457 = vmatpush1.msra.mxu0 0.0
    %458 = vmatprep.subr.mxu0 0.0
    %459 = vmatpush1.msra.mxu0 0.0
    %460 = vmatprep.subr.mxu0 0.0
    %461 = vmatpush1.msra.mxu0 0.0
    %462 = vmatprep.subr.mxu0 0.0
    %463 = vmatpush1.msra.mxu0 0.0
    %464 = vmatprep.subr.mxu0 0.0
    %465 = vmatpush1.msra.mxu0 0.0
    %466 = vmatprep.subr.mxu0 0.0
    %467 = vmatpush1.msra.mxu0 0.0
    %468 = vmatprep.subr.mxu0 0.0
    %469 = vmatpush1.msra.mxu0 0.0
    %470 = vmatprep.subr.mxu0 0.0
    %471 = vmatpush1.msra.mxu0 0.0
    %472 = vmatprep.subr.mxu0 0.0
    %473 = vmatpush1.msra.mxu0 0.0
    %474 = vmatprep.subr.mxu0 0.0
    %475 = vmatpush1.msra.mxu0 0.0
    %476 = vmatprep.subr.mxu0 0.0
    %477 = vmatpush1.msra.mxu0 0.0
    %478 = vmatprep.subr.mxu0 0.0
    %479 = vmatpush1.msra.mxu0 0.0
    %480 = vmatprep.subr.mxu0 0.0
    %481 = vmatpush1.msra.mxu0 0.0
    %482 = vmatprep.subr.mxu0 0.0
    %483 = vmatpush1.msra.mxu0 0.0
    %484 = vmatprep.subr.mxu0 0.0
    %485 = vmatpush1.msra.mxu0 0.0
    %486 = vmatprep.subr.mxu0 0.0
    %487 = vmatpush1.msra.mxu0 0.0
    %488 = vmatprep.subr.mxu0 0.0
    %489 = vmatpush1.msra.mxu0 0.0
    %490 = vmatprep.mubr.f32.mxu0 0.0
    %v491 = vand.u32 %v33, 4294901760
    %492 = vmatmul.mubr.f32.gmra.mrb[0].mxu0 %v491
    %v493 = vpop.f32.mrb[0].mxu0
    %v494 = vadd.f32 %v399, %v493
    %v495 = vpop.f32.mrb[0].mxu0
    %496 = vdwg.mxu0
    %497 = vmatprep.subr.mxu0 0.0
    %v498 = vand.u32 %v16, 4294901760
    %499 = vmatpush1.msra.mxu0 %v498
    %500 = vmatprep.subr.mxu0 0.0
    %v501 = vand.u32 %v17, 4294901760
    %502 = vmatpush1.msra.mxu0 %v501
    %503 = vmatprep.subr.mxu0 0.0
    %v504 = vand.u32 %v18, 4294901760
    %505 = vmatpush1.msra.mxu0 %v504
    %506 = vmatprep.subr.mxu0 0.0
    %v507 = vand.u32 %v19, 4294901760
    %508 = vmatpush1.msra.mxu0 %v507
    %509 = vmatprep.subr.mxu0 0.0
    %v510 = vand.u32 %v20, 4294901760
    %511 = vmatpush1.msra.mxu0 %v510
    %512 = vmatprep.subr.mxu0 0.0
    %v513 = vand.u32 %v21, 4294901760
    %514 = vmatpush1.msra.mxu0 %v513
    %515 = vmatprep.subr.mxu0 0.0
    %v516 = vand.u32 %v22, 4294901760
    %517 = vmatpush1.msra.mxu0 %v516
    %518 = vmatprep.subr.mxu0 0.0
    %v519 = vand.u32 %v37, 4294901760
    %520 = vmatpush1.msra.mxu0 %v519
    %521 = vmatprep.subr.mxu0 0.0
    %522 = vmatpush1.msra.mxu0 0.0
    %523 = vmatprep.subr.mxu0 0.0
    %524 = vmatpush1.msra.mxu0 0.0
    %525 = vmatprep.subr.mxu0 0.0
    %526 = vmatpush1.msra.mxu0 0.0
    %527 = vmatprep.subr.mxu0 0.0
    %528 = vmatpush1.msra.mxu0 0.0
    %529 = vmatprep.subr.mxu0 0.0
    %530 = vmatpush1.msra.mxu0 0.0
    %531 = vmatprep.subr.mxu0 0.0
    %532 = vmatpush1.msra.mxu0 0.0
    %533 = vmatprep.subr.mxu0 0.0
    %534 = vmatpush1.msra.mxu0 0.0
    %535 = vmatprep.subr.mxu0 0.0
    %536 = vmatpush1.msra.mxu0 0.0
    %537 = vmatprep.subr.mxu0 0.0
    %538 = vmatpush1.msra.mxu0 0.0
    %539 = vmatprep.subr.mxu0 0.0
    %540 = vmatpush1.msra.mxu0 0.0
    %541 = vmatprep.subr.mxu0 0.0
    %542 = vmatpush1.msra.mxu0 0.0
    %543 = vmatprep.subr.mxu0 0.0
    %544 = vmatpush1.msra.mxu0 0.0
    %545 = vmatprep.subr.mxu0 0.0
    %546 = vmatpush1.msra.mxu0 0.0
    %547 = vmatprep.subr.mxu0 0.0
    %548 = vmatpush1.msra.mxu0 0.0
    %549 = vmatprep.subr.mxu0 0.0
    %550 = vmatpush1.msra.mxu0 0.0
    %551 = vmatprep.subr.mxu0 0.0
    %552 = vmatpush1.msra.mxu0 0.0
    %553 = vmatprep.subr.mxu0 0.0
    %554 = vmatpush1.msra.mxu0 0.0
    %555 = vmatprep.subr.mxu0 0.0
    %556 = vmatpush1.msra.mxu0 0.0
    %557 = vmatprep.subr.mxu0 0.0
    %558 = vmatpush1.msra.mxu0 0.0
    %559 = vmatprep.subr.mxu0 0.0
    %560 = vmatpush1.msra.mxu0 0.0
    %561 = vmatprep.subr.mxu0 0.0
    %562 = vmatpush1.msra.mxu0 0.0
    %563 = vmatprep.subr.mxu0 0.0
    %564 = vmatpush1.msra.mxu0 0.0
    %565 = vmatprep.subr.mxu0 0.0
    %566 = vmatpush1.msra.mxu0 0.0
    %567 = vmatprep.subr.mxu0 0.0
    %568 = vmatpush1.msra.mxu0 0.0
    %569 = vmatprep.mubr.f32.mxu0 0.0
    %v570 = vand.u32 %v33, 4294901760
    %571 = vmatmul.mubr.f32.gmra.mrb[0].mxu0 %v570
    %v572 = vpop.f32.mrb[0].mxu0
    %v573 = vadd.f32 %v494, %v572
    %v574 = vpop.f32.mrb[0].mxu0
    %575 = vdwg.mxu0
    %577 = vrot.lane.b32.xlu0 %v573, 92
    %v578 = vpop.permute.xlu0 %577
    %v580 = vmax.f32 %v573, %v578
    %582 = vrot.lane.b32.xlu0 %v580, 110
    %v583 = vpop.permute.xlu0 %582
    %v585 = vmax.f32 %v580, %v583
    %v586 = vmax.f32 %v585, 0.0
    %vm587 = vcmask 140288
    %588 = vst.msk [vmem:[#allocation2] sm:$0x3] %vm587, %v586
    // Predicated region
    $region14: #{cnn_forward.1} parent=1 // pred_check
      _
    $region15: #{cnn_forward.1} parent=1 // pred_check_branch
      %590 = sbr.rel (0) target = $region17
    $region16: #{cnn_forward.1} parent=1 // pred_region
      %s592 = ssub.s32 32, 32
      %593 = vsyncadd [#allocation3], %s592
      %s595 = sshll.u32 [#allocation2], 4
      %s596 = int_to_ptr.vmem [resolvable:$true] %s595
      %598 = dma.vmem_to_hbm [thread:$0]  %s596, 32, %s3, [#allocation3]
    $region17: #{cnn_forward.1} parent=1 // pred_fallthru
      _
    // Predicated region
    $region18: #{cnn_forward.1} parent=1 // pred_check
      _
    $region19: #{cnn_forward.1} parent=1 // pred_check_branch
      %600 = sbr.rel (0) target = $region21
    $region20: #{cnn_forward.1} parent=1 // pred_region
      %601 = dma.done [#allocation3], 32
    $region21: #{cnn_forward.1} parent=1 // pred_fallthru
      _
    %602 = vsyncpa [#allocation3], 1

</llo_original>
